<compile_context>
chip_gen: v5e
topology: v5e:2x2
jax: 0.10.0
libtpu: 0.0.40
codegen_flags: <defaults>
</compile_context>

<pallas_src>
import functools

import jax
import jax.numpy as jnp
from jax.experimental import pallas as pl
from jax.experimental.pallas import tpu as pltpu


def _round_up(x, n):
    return ((x + n - 1) // n) * n


# ----------------------------- kernels --------------------------------------

def _mrl_fused_kernel(x_ref, w_ref, b_ref, out_ref):
    """Small-C path: all G classifiers fused into ONE lane-dense MXU matmul.

    x_ref  : (TB, D)       batch tile
    w_ref  : (D, G*Cp)     column-concatenated weights (rows >= m[g] zeroed per doll)
    b_ref  : (1, G*Cp)     f32 column-concatenated biases
    out_ref: (TB, G*Cp)    lane-dense logits slab
    """
    acc = jnp.dot(x_ref[...], w_ref[...], preferred_element_type=jnp.float32)
    out_ref[...] = (acc + b_ref[...]).astype(out_ref.dtype)


def _mrl_perdoll_kernel(m, c_pad, x_ref, *refs):
    """Large-C path: one exact-K matmul per doll, stores into one lane-dense slab.

    refs layout: (w_0 .. w_{G-1}, b_cat, out)
      w_g   : (m[g], Cp)
      b_cat : (1, G*Cp)    f32
      out   : (TB, G*Cp)
    """
    G = len(m)
    w_refs = refs[:G]
    b = refs[G][...]                       # read bias slab once per tile
    out_ref = refs[G + 1]

    x = x_ref[...]                         # load the batch tile once, reuse for all G
    for g in range(G):                     # G is static -> fully unrolled
        lo = g * c_pad                     # static, 128-aligned column offset
        acc = jnp.dot(x[:, :m[g]], w_refs[g][...],
                      preferred_element_type=jnp.float32)
        acc = acc + b[:, lo:lo + c_pad]
        out_ref[:, lo:lo + c_pad] = acc.astype(out_ref.dtype)


# ----------------------------- wrapper ---------------------------------------

def _pick_block_b(B):
    """Generation-aware batch-tile heuristic."""
    try:
        kind = jax.devices()[0].device_kind.lower()
    except Exception:  # pragma: no cover - defensive
        kind = ""
    is_v7 = ("v7" in kind) or ("7x" in kind) or ("tpu7" in kind)
    cap = 256 if is_v7 else 512          # v7x: 64 MiB VMEM/TC; v5e/v6e: 128 MiB
    if is_v7 and B > 128:
        bb = _round_up(-(-B // 2), 8)    # >=2 grid steps so both TCs get work
    else:
        bb = _round_up(B, 8)
    return max(8, min(cap, bb))


def mrl_layer(x, weights, biases, m, *, block_b=None):
    """JAX/Pallas equivalent of MRLLayer.forward.

    x        : (B, D) features, D >= max(m). f32 or bf16.
    weights  : list of G arrays, weights[g] shape (m[g], C)
               NOTE: (in_features, out_features) layout = nn.Linear.weight.T
    biases   : list of G arrays, shape (C,)
    m        : list of G nesting dims (static Python ints)
    Returns a list of G (B, C) logit arrays (same dtype as x).
    """
    m = tuple(int(d) for d in m)
    G = len(m)
    B, D = x.shape
    C = weights[0].shape[1]
    assert max(m) <= D
    for g in range(G):
        assert weights[g].shape == (m[g], C), (
            "weights[g] must be (m[g], num_classes), i.e. nn.Linear.weight.T")
        assert biases[g].shape == (C,)

    c_pad = _round_up(C, 128)            # lane-aligned per-doll column width
    n_out = G * c_pad                    # lane-dense output slab width
    fused = C < 128                      # fuse when C under-fills the 128 lanes

    # Biases: one f32 (1, G*Cp) slab, added once per grid step.
    b_cat = jnp.zeros((1, n_out), jnp.float32)
    for g in range(G):
        b_cat = b_cat.at[0, g * c_pad:g * c_pad + C].set(
            biases[g].astype(jnp.float32))

    w_dtype = weights[0].dtype
    if fused:
        # One (D, G*Cp) weight slab; rows >= m[g] zeroed -> nested-prefix semantics.
        # TODO(synk): in a real model, pack w_cat/b_cat once at init, not per forward.
        w_cat = jnp.zeros((D, n_out), w_dtype)
        for g in range(G):
            w_cat = w_cat.at[:m[g], g * c_pad:g * c_pad + C].set(
                weights[g].astype(w_dtype))
        w_args = (w_cat,)
        w_shapes = [(D, n_out)]
        kernel = _mrl_fused_kernel
    else:
        # Keep K = m[g] exact (no wasted FLOPs); only pad the lane (C) dim.
        w_args = tuple(jnp.pad(weights[g], ((0, 0), (0, c_pad - C)))
                       for g in range(G))
        w_shapes = [(m[g], c_pad) for g in range(G)]
        kernel = functools.partial(_mrl_perdoll_kernel, m, c_pad)

    # Batch tiling.
    if block_b is None:
        block_b = _pick_block_b(B)
    block_b = max(8, _round_up(int(block_b), 8))
    pad_b = (-B) % block_b
    if pad_b:
        x = jnp.pad(x, ((0, pad_b), (0, 0)))
    Bp = B + pad_b
    grid = (Bp // block_b,)

    # Explicit VMEM budget: 2x x-tile + 2x out-tile + (single-buffered) weights + bias.
    dsz = x.dtype.itemsize
    w_bytes = sum(int(wa.size) * wa.dtype.itemsize for wa in w_args)
    b_bytes = n_out * 4
    need = 2 * block_b * D * dsz + 2 * block_b * n_out * dsz + w_bytes + b_bytes
    vmem_limit = int(min(max(2 * need, 32 << 20), 64 << 20))

    if fused:
        flops_total = 2 * Bp * D * n_out
    else:
        flops_total = sum(2 * Bp * m[g] * c_pad for g in range(G))
    bytes_accessed = Bp * D * dsz + w_bytes + b_bytes + Bp * n_out * dsz
    cost = pl.CostEstimate(flops=flops_total, transcendentals=0,
                           bytes_accessed=bytes_accessed)

    x_spec = pl.BlockSpec((block_b, D), lambda i: (i, 0))
    out_spec = pl.BlockSpec((block_b, n_out), lambda i: (i, 0))
    out_shape = jax.ShapeDtypeStruct((Bp, n_out), x.dtype)

    def _invariant_spec(shape, single_buffer):
        # Weights/bias never change across grid steps; single-buffer them to halve
        # their VMEM footprint (matters most on v7x's 64 MiB VMEM).
        if single_buffer:
            return pl.BlockSpec(shape, lambda i: (0, 0),
                                pipeline_mode=pl.Buffered(1))
        return pl.BlockSpec(shape, lambda i: (0, 0))

    def _call(single_buffer_invariants):
        in_specs = [x_spec]
        in_specs += [_invariant_spec(s, single_buffer_invariants) for s in w_shapes]
        in_specs += [_invariant_spec((1, n_out), single_buffer_invariants)]
        return pl.pallas_call(
            kernel,
            out_shape=out_shape,
            grid_spec=pltpu.PrefetchScalarGridSpec(
                num_scalar_prefetch=0,
                grid=grid,
                in_specs=in_specs,
                out_specs=out_spec,
            ),
            compiler_params=pltpu.CompilerParams(
                dimension_semantics=("parallel",),    # batch tiles are independent
                vmem_limit_bytes=vmem_limit),
            cost_estimate=cost,
        )(x, *w_args, b_cat)

    try:
        slab = _call(True)
    except Exception:
        # Fall back to default double-buffering if this build rejects Buffered(1).
        slab = _call(False)

    return [slab[:B, g * c_pad:g * c_pad + C] for g in range(G)]


# ----------------------------- reference & demo ------------------------------

def _reference(x, weights, biases, m):
    """Pure-JAX reference (matches nn.Linear on nested prefixes)."""
    xf = x.astype(jnp.float32)
    return [
        jnp.dot(xf[:, :m[g]], weights[g].astype(jnp.float32),
                precision=jax.lax.Precision.HIGHEST)
        + biases[g].astype(jnp.float32)
        for g in range(len(m))
    ]


if __name__ == "__main__":
    key = jax.random.PRNGKey(0)

    def run_case(B, D, C, m, case_key):
        G = len(m)
        keys = jax.random.split(case_key, 2 * G + 1)
        x = jax.random.normal(keys[0], (B, D), dtype=jnp.float32)
        weights = [
            jax.random.normal(keys[1 + g], (m[g], C), dtype=jnp.float32)
            / jnp.sqrt(jnp.float32(m[g]))
            for g in range(G)
        ]
        biases = [
            0.1 * jax.random.normal(keys[1 + G + g], (C,), dtype=jnp.float32)
            for g in range(G)
        ]
        outs = jax.block_until_ready(mrl_layer(x, weights, biases, m))
        refs = _reference(x, weights, biases, m)
        for g in range(G):
            assert outs[g].shape == (B, C), outs[g].shape
            assert jnp.allclose(outs[g], refs[g], rtol=1e-4, atol=1e-4), (
                g, float(jnp.max(jnp.abs(outs[g] - refs[g]))))

    k1, k2 = jax.random.split(key)
    # Small shapes consistent with the module: batch=8, hidden=32, m=[8,16,32], 16 classes.
    run_case(B=8, D=32, C=16, m=[8, 16, 32], case_key=k1)   # fused small-C path
    # Also exercise the large-C (per-doll matmul) path.
    run_case(B=16, D=64, C=128, m=[16, 64], case_key=k2)

    print("KERNEL_OK")
</pallas_src>

<mosaic_0001>
module attributes {stable_mosaic.version = 11 : i64} {
  func.func @_mrl_fused_kernel(%arg0: i32, %arg1: memref<8x32xf32, #tpu.memory_space<vmem>>, %arg2: memref<32x384xf32, #tpu.memory_space<vmem>>, %arg3: memref<1x384xf32, #tpu.memory_space<vmem>>, %arg4: memref<8x384xf32, #tpu.memory_space<vmem>>) attributes {dimension_semantics = [#tpu.dimension_semantics<parallel>], iteration_bounds = array<i64: 1>, scalar_prefetch = 0 : i64, scratch_operands = 0 : i64, tpu.core_type = #tpu.core_type<tc>, window_params = [{transform_indices = @transform_0, window_bounds = array<i64: 8, 32>}, {pipeline_mode = #tpu.pipeline_mode<synchronous>, transform_indices = @transform_1, window_bounds = array<i64: 32, 384>}, {pipeline_mode = #tpu.pipeline_mode<synchronous>, transform_indices = @transform_2, window_bounds = array<i64: 1, 384>}, {transform_indices = @transform_3, window_bounds = array<i64: 8, 384>}]} {
    %c0 = arith.constant 0 : index
    %c0_0 = arith.constant 0 : index
    %0 = vector.load %arg1[%c0, %c0_0] : memref<8x32xf32, #tpu.memory_space<vmem>>, vector<8x32xf32>
    %c0_1 = arith.constant 0 : index
    %c0_2 = arith.constant 0 : index
    %1 = vector.load %arg2[%c0_1, %c0_2] : memref<32x384xf32, #tpu.memory_space<vmem>>, vector<32x384xf32>
    %cst = arith.constant dense<0.000000e+00> : vector<8x384xf32>
    %2 = tpu.matmul %0, %1, %cst {dimension_numbers = #tpu.dot_dimension_numbers<[1], [0], [0], [1], [0, 0, 1, 1], [], []>} : vector<8x32xf32>, vector<32x384xf32>, vector<8x384xf32> -> vector<8x384xf32>
    %c0_3 = arith.constant 0 : index
    %c0_4 = arith.constant 0 : index
    %3 = vector.load %arg3[%c0_3, %c0_4] : memref<1x384xf32, #tpu.memory_space<vmem>>, vector<1x384xf32>
    %4 = vector.broadcast %3 : vector<1x384xf32> to vector<8x384xf32>
    %5 = arith.addf %2, %4 : vector<8x384xf32>
    %c0_5 = arith.constant 0 : index
    %c0_6 = arith.constant 0 : index
    %6 = vector.load %arg4[%c0_5, %c0_6] : memref<8x384xf32, #tpu.memory_space<vmem>>, vector<8x384xf32>
    tpu.vector_store %arg4[%c0_5, %c0_6], %5 {strides = array<i32>} : memref<8x384xf32, #tpu.memory_space<vmem>>, vector<8x384xf32>,
    return
  }
  func.func @transform_0(%arg0: i32) -> (i32, i32) {
    %c0_i32 = arith.constant 0 : i32
    %c0_i32_0 = arith.constant 0 : i32
    return %arg0, %c0_i32 : i32, i32
  }
  func.func @transform_1(%arg0: i32) -> (i32, i32) {
    %c0_i32 = arith.constant 0 : i32
    %c0_i32_0 = arith.constant 0 : i32
    %c0_i32_1 = arith.constant 0 : i32
    return %c0_i32, %c0_i32_0 : i32, i32
  }
  func.func @transform_2(%arg0: i32) -> (i32, i32) {
    %c0_i32 = arith.constant 0 : i32
    %c0_i32_0 = arith.constant 0 : i32
    %c0_i32_1 = arith.constant 0 : i32
    return %c0_i32, %c0_i32_0 : i32, i32
  }
  func.func @transform_3(%arg0: i32) -> (i32, i32) {
    %c0_i32 = arith.constant 0 : i32
    %c0_i32_0 = arith.constant 0 : i32
    return %arg0, %c0_i32 : i32, i32
  }
}

module attributes {stable_mosaic.version = 11 : i64} {
  func.func @_mrl_fused_kernel(%arg0: i32, %arg1: memref<8x32xf32, #tpu.memory_space<vmem>>, %arg2: memref<32x384xf32, #tpu.memory_space<vmem>>, %arg3: memref<1x384xf32, #tpu.memory_space<vmem>>, %arg4: memref<8x384xf32, #tpu.memory_space<vmem>>) attributes {dimension_semantics = [#tpu.dimension_semantics<parallel>], iteration_bounds = array<i64: 1>, scalar_prefetch = 0 : i64, scratch_operands = 0 : i64, tpu.core_type = #tpu.core_type<tc>, window_params = [{transform_indices = @transform_0, window_bounds = array<i64: 8, 32>}, {pipeline_mode = #tpu.pipeline_mode<synchronous>, transform_indices = @transform_1, window_bounds = array<i64: 32, 384>}, {pipeline_mode = #tpu.pipeline_mode<synchronous>, transform_indices = @transform_2, window_bounds = array<i64: 1, 384>}, {transform_indices = @transform_3, window_bounds = array<i64: 8, 384>}]} {
    %c0 = arith.constant 0 : index
    %c0_0 = arith.constant 0 : index
    %0 = vector.load %arg1[%c0, %c0_0] : memref<8x32xf32, #tpu.memory_space<vmem>>, vector<8x32xf32>
    %c0_1 = arith.constant 0 : index
    %c0_2 = arith.constant 0 : index
    %1 = vector.load %arg2[%c0_1, %c0_2] : memref<32x384xf32, #tpu.memory_space<vmem>>, vector<32x384xf32>
    %cst = arith.constant dense<0.000000e+00> : vector<8x384xf32>
    %2 = tpu.matmul %0, %1, %cst {dimension_numbers = #tpu.dot_dimension_numbers<[1], [0], [0], [1], [0, 0, 1, 1], [], []>} : vector<8x32xf32>, vector<32x384xf32>, vector<8x384xf32> -> vector<8x384xf32>
    %c0_3 = arith.constant 0 : index
    %c0_4 = arith.constant 0 : index
    %3 = vector.load %arg3[%c0_3, %c0_4] : memref<1x384xf32, #tpu.memory_space<vmem>>, vector<1x384xf32>
    %4 = vector.broadcast %3 : vector<1x384xf32> to vector<8x384xf32>
    %5 = arith.addf %2, %4 : vector<8x384xf32>
    %c0_5 = arith.constant 0 : index
    %c0_6 = arith.constant 0 : index
    %6 = vector.load %arg4[%c0_5, %c0_6] : memref<8x384xf32, #tpu.memory_space<vmem>>, vector<8x384xf32>
    tpu.vector_store %arg4[%c0_5, %c0_6], %5 {strides = array<i32>} : memref<8x384xf32, #tpu.memory_space<vmem>>, vector<8x384xf32>,
    return
  }
  func.func @transform_0(%arg0: i32) -> (i32, i32) {
    %c0_i32 = arith.constant 0 : i32
    %c0_i32_0 = arith.constant 0 : i32
    return %arg0, %c0_i32 : i32, i32
  }
  func.func @transform_1(%arg0: i32) -> (i32, i32) {
    %c0_i32 = arith.constant 0 : i32
    %c0_i32_0 = arith.constant 0 : i32
    %c0_i32_1 = arith.constant 0 : i32
    return %c0_i32, %c0_i32_0 : i32, i32
  }
  func.func @transform_2(%arg0: i32) -> (i32, i32) {
    %c0_i32 = arith.constant 0 : i32
    %c0_i32_0 = arith.constant 0 : i32
    %c0_i32_1 = arith.constant 0 : i32
    return %c0_i32, %c0_i32_0 : i32, i32
  }
  func.func @transform_3(%arg0: i32) -> (i32, i32) {
    %c0_i32 = arith.constant 0 : i32
    %c0_i32_0 = arith.constant 0 : i32
    return %arg0, %c0_i32 : i32, i32
  }
}

</mosaic_0001>

<llo_original>
// kernel: tpu_custom_call.1
$region0: #{tpu_custom_call.1}
  #allocation0 [shape = 'u32[]', space=smem, size = 0x4, offset = 0x4, fixed_abs, tag = 'smem constant byte address 0x4 - core index']
  #allocation1 [shape = 'u32[72,128]{1,0:T(1,128)}', space=vmem, size = 0x9000, scoped, tag = 'internal scratch']
  %s0 = inlined_call_operand.hbm [shape: f32[8,32], index: 0, kind: input, shape index: {}]
  %s1 = inlined_call_operand.hbm [shape: f32[32,384], index: 1, kind: input, shape index: {}]
  %s2 = inlined_call_operand.hbm [shape: f32[1,384], index: 2, kind: input, shape index: {}]
  %s3 = inlined_call_operand.hbm [shape: f32[8,384], index: 3, kind: output, shape index: {}]
  %s4 = sld [smem:[#allocation0]]
  $region34: #{tpu_custom_call.1} parent=0
    _
  %s6 = ssub.s32 1, %s4
  %s7 = scalar_select 0, %s6, %s4
  $region1: #{tpu_custom_call.1} parent=0
    #allocation2 [shape = 'u8[4096]{0}', space=vmem, size = 0x1000, scoped, tag = 'input window, operand 0, single buffered']
    #allocation3 [shape = 's32[1]{0}', space=sflag, size = 0x4, scoped, tag = 'scoped memory for tpu_custom_call.1']
    #allocation4 [shape = 's32[1]{0}', space=sflag, size = 0x4, scoped, tag = 'scoped memory for tpu_custom_call.1']
    #allocation5 [shape = 'u8[49152]{0}', space=vmem, size = 0xc000, scoped, tag = 'input window, operand 1, single buffered']
    #allocation6 [shape = 's32[1]{0}', space=sflag, size = 0x4, scoped, tag = 'scoped memory for tpu_custom_call.1']
    #allocation7 [shape = 'u8[1536]{0}', space=vmem, size = 0x800, scoped, tag = 'input window, operand 2, single buffered']
    #allocation8 [shape = 'u8[12288]{0}', space=vmem, size = 0x3000, scoped, tag = 'output window, operand 0, single buffered']
    %8 = vsyncpa [#allocation3], 0
    %9 = vsyncpa [#allocation6], 0
    %10 = vsyncpa [#allocation4], 0
    // Predicated region
    $region2: #{tpu_custom_call.1} parent=1 // pred_check
      _
    $region3: #{tpu_custom_call.1} parent=1 // pred_check_branch
      %12 = sbr.rel (0) target = $region5
    $region4: #{tpu_custom_call.1} parent=1 // pred_region
      %14 = vsyncadd [#allocation3], 0
      %s16 = sshll.u32 %s0, 4
      %s17 = int_to_ptr.hbm [resolvable:$true] %s16
      %s18 = sshll.u32 [#allocation2], 4
      %s19 = int_to_ptr.vmem [resolvable:$true] %s18
      %21 = dma.hbm_to_vmem [thread:$0]  %s17, 128, %s19, [#allocation3]
    $region5: #{tpu_custom_call.1} parent=1 // pred_fallthru
      _
    // Predicated region
    $region6: #{tpu_custom_call.1} parent=1 // pred_check
      _
    $region7: #{tpu_custom_call.1} parent=1 // pred_check_branch
      %23 = sbr.rel (0) target = $region9
    $region8: #{tpu_custom_call.1} parent=1 // pred_region
      %25 = vsyncadd [#allocation6], 0
      %s26 = sshll.u32 %s1, 4
      %s27 = int_to_ptr.hbm [resolvable:$true] %s26
      %s28 = sshll.u32 [#allocation5], 4
      %s29 = int_to_ptr.vmem [resolvable:$true] %s28
      %34 = dma.hbm_to_vmem [thread:$0]  %s27, 1536, %s29, [#allocation6], 384, 384, 24
    $region9: #{tpu_custom_call.1} parent=1 // pred_fallthru
      _
    // Predicated region
    $region10: #{tpu_custom_call.1} parent=1 // pred_check
      _
    $region11: #{tpu_custom_call.1} parent=1 // pred_check_branch
      %36 = sbr.rel (0) target = $region13
    $region12: #{tpu_custom_call.1} parent=1 // pred_region
      %38 = vsyncadd [#allocation6], 0
      %s40 = sshll.u32 %s2, 4
      %s41 = int_to_ptr.hbm [resolvable:$true] %s40
      %s42 = sshll.u32 [#allocation7], 4
      %s43 = int_to_ptr.vmem [resolvable:$true] %s42
      %45 = dma.hbm_to_vmem [thread:$0]  %s41, 48, %s43, [#allocation6]
    $region13: #{tpu_custom_call.1} parent=1 // pred_fallthru
      _
    // Predicated region
    $region14: #{tpu_custom_call.1} parent=1 // pred_check
      _
    $region15: #{tpu_custom_call.1} parent=1 // pred_check_branch
      %47 = sbr.rel (0) target = $region17
    $region16: #{tpu_custom_call.1} parent=1 // pred_region
      %49 = dma.done [#allocation3], 128
    $region17: #{tpu_custom_call.1} parent=1 // pred_fallthru
      _
    // Predicated region
    $region18: #{tpu_custom_call.1} parent=1 // pred_check
      _
    $region19: #{tpu_custom_call.1} parent=1 // pred_check_branch
      %51 = sbr.rel (0) target = $region21
    $region20: #{tpu_custom_call.1} parent=1 // pred_region
      %53 = dma.done [#allocation6], 1536
    $region21: #{tpu_custom_call.1} parent=1 // pred_fallthru
      _
    // Predicated region
    $region22: #{tpu_custom_call.1} parent=1 // pred_check
      _
    $region23: #{tpu_custom_call.1} parent=1 // pred_check_branch
      %55 = sbr.rel (0) target = $region25
    $region24: #{tpu_custom_call.1} parent=1 // pred_region
      %57 = dma.done [#allocation6], 48
    $region25: #{tpu_custom_call.1} parent=1 // pred_fallthru
      _
    %v58 = vld [vmem:[#allocation2] sm:$0xff]
    %v59 = vld [vmem:[#allocation5] sm:$0xff]
    %v60 = vld [vmem:[#allocation5 + $0x8] sm:$0xff]
    %v61 = vld [vmem:[#allocation5 + $0x10] sm:$0xff]
    %v62 = vld [vmem:[#allocation5 + $0x18] sm:$0xff]
    %v63 = vld [vmem:[#allocation5 + $0x20] sm:$0xff]
    %v64 = vld [vmem:[#allocation5 + $0x28] sm:$0xff]
    %v65 = vld [vmem:[#allocation5 + $0x30] sm:$0xff]
    %v66 = vld [vmem:[#allocation5 + $0x38] sm:$0xff]
    %v67 = vld [vmem:[#allocation5 + $0x40] sm:$0xff]
    %v68 = vld [vmem:[#allocation5 + $0x48] sm:$0xff]
    %v69 = vld [vmem:[#allocation5 + $0x50] sm:$0xff]
    %v70 = vld [vmem:[#allocation5 + $0x58] sm:$0xff]
    %v71 = vld [vmem:[#allocation7] sm:$0x7]
    %v73 = vperm.slane %v71, 0
    %v74 = vperm.slane %v71, 1
    %v75 = vperm.slane %v71, 2
    %vm79 = vcmask 261120
    %v81 = vsel %vm79, %v58, 0
    %83 = vmatpush.msra.mxu0 0.0
    %84 = vmatpush.msra.mxu0 0.0
    %85 = vmatpush.msra.mxu0 0.0
    %86 = vmatpush.msra.mxu0 0.0
    %87 = vmatpush.msra.mxu0 0.0
    %88 = vmatpush.msra.mxu0 0.0
    %89 = vmatpush.msra.mxu0 0.0
    %90 = vmatpush.msra.mxu0 0.0
    %91 = vmatpush.msra.mxu0 0.0
    %92 = vmatpush.msra.mxu0 0.0
    %93 = vmatpush.msra.mxu0 0.0
    %94 = vmatpush.msra.mxu0 0.0
    %95 = vmatpush.msra.mxu0 %v68
    %96 = vmatpush.msra.mxu0 %v65
    %97 = vmatpush.msra.mxu0 %v62
    %98 = vmatpush.msra.mxu0 %v59
    %99 = vmatmul.f32.gmra.mxu0 %v81
    %v100 = vpop.f32.mrf.mxu0
    %v101 = vadd.f32 %v73, %v100
    %102 = vdwg.mxu0
    %103 = vmatpush.msra.mxu0 0.0
    %104 = vmatpush.msra.mxu0 0.0
    %105 = vmatpush.msra.mxu0 0.0
    %106 = vmatpush.msra.mxu0 0.0
    %107 = vmatpush.msra.mxu0 0.0
    %108 = vmatpush.msra.mxu0 0.0
    %109 = vmatpush.msra.mxu0 0.0
    %110 = vmatpush.msra.mxu0 0.0
    %111 = vmatpush.msra.mxu0 0.0
    %112 = vmatpush.msra.mxu0 0.0
    %113 = vmatpush.msra.mxu0 0.0
    %114 = vmatpush.msra.mxu0 0.0
    %115 = vmatpush.msra.mxu0 %v69
    %116 = vmatpush.msra.mxu0 %v66
    %117 = vmatpush.msra.mxu0 %v63
    %118 = vmatpush.msra.mxu0 %v60
    %119 = vmatmul.f32.gmra.mxu0 %v81
    %v120 = vpop.f32.mrf.mxu0
    %v121 = vadd.f32 %v74, %v120
    %122 = vdwg.mxu0
    %123 = vmatpush.msra.mxu0 0.0
    %124 = vmatpush.msra.mxu0 0.0
    %125 = vmatpush.msra.mxu0 0.0
    %126 = vmatpush.msra.mxu0 0.0
    %127 = vmatpush.msra.mxu0 0.0
    %128 = vmatpush.msra.mxu0 0.0
    %129 = vmatpush.msra.mxu0 0.0
    %130 = vmatpush.msra.mxu0 0.0
    %131 = vmatpush.msra.mxu0 0.0
    %132 = vmatpush.msra.mxu0 0.0
    %133 = vmatpush.msra.mxu0 0.0
    %134 = vmatpush.msra.mxu0 0.0
    %135 = vmatpush.msra.mxu0 %v70
    %136 = vmatpush.msra.mxu0 %v67
    %137 = vmatpush.msra.mxu0 %v64
    %138 = vmatpush.msra.mxu0 %v61
    %139 = vmatmul.f32.gmra.mxu0 %v81
    %v140 = vpop.f32.mrf.mxu0
    %v141 = vadd.f32 %v75, %v140
    %142 = vdwg.mxu0
    %143 = vst [vmem:[#allocation8] sm:$0xff] %v101
    %144 = vst [vmem:[#allocation8 + $0x8] sm:$0xff] %v121
    %145 = vst [vmem:[#allocation8 + $0x10] sm:$0xff] %v141
    // Predicated region
    $region26: #{tpu_custom_call.1} parent=1 // pred_check
      _
    $region27: #{tpu_custom_call.1} parent=1 // pred_check_branch
      %147 = sbr.rel (0) target = $region29
    $region28: #{tpu_custom_call.1} parent=1 // pred_region
      %149 = vsyncadd [#allocation4], 0
      %s151 = sshll.u32 [#allocation8], 4
      %s152 = int_to_ptr.vmem [resolvable:$true] %s151
      %s153 = sshll.u32 %s3, 4
      %s154 = int_to_ptr.hbm [resolvable:$true] %s153
      %156 = dma.vmem_to_hbm [thread:$0]  %s152, 384, %s154, [#allocation4]
    $region29: #{tpu_custom_call.1} parent=1 // pred_fallthru
      _
    // Predicated region
    $region30: #{tpu_custom_call.1} parent=1 // pred_check
      _
    $region31: #{tpu_custom_call.1} parent=1 // pred_check_branch
      %158 = sbr.rel (0) target = $region33
    $region32: #{tpu_custom_call.1} parent=1 // pred_region
      %160 = dma.done [#allocation4], 384
    $region33: #{tpu_custom_call.1} parent=1 // pred_fallthru
      _
    %161 = vsyncpa [#allocation3], 1
    %162 = vsyncpa [#allocation6], 1
    %163 = vsyncpa [#allocation4], 1

// kernel: tpu_custom_call.1
$region0: #{tpu_custom_call.1}
  #allocation0 [shape = 'u32[]', space=smem, size = 0x4, offset = 0x4, fixed_abs, tag = 'smem constant byte address 0x4 - core index']
  #allocation1 [shape = 'u32[72,128]{1,0:T(1,128)}', space=vmem, size = 0x9000, scoped, tag = 'internal scratch']
  %s0 = inlined_call_operand.hbm [shape: f32[8,32], index: 0, kind: input, shape index: {}]
  %s1 = inlined_call_operand.hbm [shape: f32[32,384], index: 1, kind: input, shape index: {}]
  %s2 = inlined_call_operand.hbm [shape: f32[1,384], index: 2, kind: input, shape index: {}]
  %s3 = inlined_call_operand.hbm [shape: f32[8,384], index: 3, kind: output, shape index: {}]
  %s4 = sld [smem:[#allocation0]]
  $region34: #{tpu_custom_call.1} parent=0
    _
  %s6 = ssub.s32 1, %s4
  %s7 = scalar_select 0, %s6, %s4
  $region1: #{tpu_custom_call.1} parent=0
    #allocation2 [shape = 'u8[4096]{0}', space=vmem, size = 0x1000, scoped, tag = 'input window, operand 0, single buffered']
    #allocation3 [shape = 's32[1]{0}', space=sflag, size = 0x4, scoped, tag = 'scoped memory for tpu_custom_call.1']
    #allocation4 [shape = 's32[1]{0}', space=sflag, size = 0x4, scoped, tag = 'scoped memory for tpu_custom_call.1']
    #allocation5 [shape = 'u8[49152]{0}', space=vmem, size = 0xc000, scoped, tag = 'input window, operand 1, single buffered']
    #allocation6 [shape = 's32[1]{0}', space=sflag, size = 0x4, scoped, tag = 'scoped memory for tpu_custom_call.1']
    #allocation7 [shape = 'u8[1536]{0}', space=vmem, size = 0x800, scoped, tag = 'input window, operand 2, single buffered']
    #allocation8 [shape = 'u8[12288]{0}', space=vmem, size = 0x3000, scoped, tag = 'output window, operand 0, single buffered']
    %8 = vsyncpa [#allocation3], 0
    %9 = vsyncpa [#allocation6], 0
    %10 = vsyncpa [#allocation4], 0
    // Predicated region
    $region2: #{tpu_custom_call.1} parent=1 // pred_check
      _
    $region3: #{tpu_custom_call.1} parent=1 // pred_check_branch
      %12 = sbr.rel (0) target = $region5
    $region4: #{tpu_custom_call.1} parent=1 // pred_region
      %14 = vsyncadd [#allocation3], 0
      %s16 = sshll.u32 %s0, 4
      %s17 = int_to_ptr.hbm [resolvable:$true] %s16
      %s18 = sshll.u32 [#allocation2], 4
      %s19 = int_to_ptr.vmem [resolvable:$true] %s18
      %21 = dma.hbm_to_vmem [thread:$0]  %s17, 128, %s19, [#allocation3]
    $region5: #{tpu_custom_call.1} parent=1 // pred_fallthru
      _
    // Predicated region
    $region6: #{tpu_custom_call.1} parent=1 // pred_check
      _
    $region7: #{tpu_custom_call.1} parent=1 // pred_check_branch
      %23 = sbr.rel (0) target = $region9
    $region8: #{tpu_custom_call.1} parent=1 // pred_region
      %25 = vsyncadd [#allocation6], 0
      %s26 = sshll.u32 %s1, 4
      %s27 = int_to_ptr.hbm [resolvable:$true] %s26
      %s28 = sshll.u32 [#allocation5], 4
      %s29 = int_to_ptr.vmem [resolvable:$true] %s28
      %34 = dma.hbm_to_vmem [thread:$0]  %s27, 1536, %s29, [#allocation6], 384, 384, 24
    $region9: #{tpu_custom_call.1} parent=1 // pred_fallthru
      _
    // Predicated region
    $region10: #{tpu_custom_call.1} parent=1 // pred_check
      _
    $region11: #{tpu_custom_call.1} parent=1 // pred_check_branch
      %36 = sbr.rel (0) target = $region13
    $region12: #{tpu_custom_call.1} parent=1 // pred_region
      %38 = vsyncadd [#allocation6], 0
      %s40 = sshll.u32 %s2, 4
      %s41 = int_to_ptr.hbm [resolvable:$true] %s40
      %s42 = sshll.u32 [#allocation7], 4
      %s43 = int_to_ptr.vmem [resolvable:$true] %s42
      %45 = dma.hbm_to_vmem [thread:$0]  %s41, 48, %s43, [#allocation6]
    $region13: #{tpu_custom_call.1} parent=1 // pred_fallthru
      _
    // Predicated region
    $region14: #{tpu_custom_call.1} parent=1 // pred_check
      _
    $region15: #{tpu_custom_call.1} parent=1 // pred_check_branch
      %47 = sbr.rel (0) target = $region17
    $region16: #{tpu_custom_call.1} parent=1 // pred_region
      %49 = dma.done [#allocation3], 128
    $region17: #{tpu_custom_call.1} parent=1 // pred_fallthru
      _
    // Predicated region
    $region18: #{tpu_custom_call.1} parent=1 // pred_check
      _
    $region19: #{tpu_custom_call.1} parent=1 // pred_check_branch
      %51 = sbr.rel (0) target = $region21
    $region20: #{tpu_custom_call.1} parent=1 // pred_region
      %53 = dma.done [#allocation6], 1536
    $region21: #{tpu_custom_call.1} parent=1 // pred_fallthru
      _
    // Predicated region
    $region22: #{tpu_custom_call.1} parent=1 // pred_check
      _
    $region23: #{tpu_custom_call.1} parent=1 // pred_check_branch
      %55 = sbr.rel (0) target = $region25
    $region24: #{tpu_custom_call.1} parent=1 // pred_region
      %57 = dma.done [#allocation6], 48
    $region25: #{tpu_custom_call.1} parent=1 // pred_fallthru
      _
    %v58 = vld [vmem:[#allocation2] sm:$0xff]
    %v59 = vld [vmem:[#allocation5] sm:$0xff]
    %v60 = vld [vmem:[#allocation5 + $0x8] sm:$0xff]
    %v61 = vld [vmem:[#allocation5 + $0x10] sm:$0xff]
    %v62 = vld [vmem:[#allocation5 + $0x18] sm:$0xff]
    %v63 = vld [vmem:[#allocation5 + $0x20] sm:$0xff]
    %v64 = vld [vmem:[#allocation5 + $0x28] sm:$0xff]
    %v65 = vld [vmem:[#allocation5 + $0x30] sm:$0xff]
    %v66 = vld [vmem:[#allocation5 + $0x38] sm:$0xff]
    %v67 = vld [vmem:[#allocation5 + $0x40] sm:$0xff]
    %v68 = vld [vmem:[#allocation5 + $0x48] sm:$0xff]
    %v69 = vld [vmem:[#allocation5 + $0x50] sm:$0xff]
    %v70 = vld [vmem:[#allocation5 + $0x58] sm:$0xff]
    %v71 = vld [vmem:[#allocation7] sm:$0x7]
    %v73 = vperm.slane %v71, 0
    %v74 = vperm.slane %v71, 1
    %v75 = vperm.slane %v71, 2
    %vm79 = vcmask 261120
    %v81 = vsel %vm79, %v58, 0
    %83 = vmatpush.msra.mxu0 0.0
    %84 = vmatpush.msra.mxu0 0.0
    %85 = vmatpush.msra.mxu0 0.0
    %86 = vmatpush.msra.mxu0 0.0
    %87 = vmatpush.msra.mxu0 0.0
    %88 = vmatpush.msra.mxu0 0.0
    %89 = vmatpush.msra.mxu0 0.0
    %90 = vmatpush.msra.mxu0 0.0
    %91 = vmatpush.msra.mxu0 0.0
    %92 = vmatpush.msra.mxu0 0.0
    %93 = vmatpush.msra.mxu0 0.0
    %94 = vmatpush.msra.mxu0 0.0
    %95 = vmatpush.msra.mxu0 %v68
    %96 = vmatpush.msra.mxu0 %v65
    %97 = vmatpush.msra.mxu0 %v62
    %98 = vmatpush.msra.mxu0 %v59
    %99 = vmatmul.f32.gmra.mxu0 %v81
    %v100 = vpop.f32.mrf.mxu0
    %v101 = vadd.f32 %v73, %v100
    %102 = vdwg.mxu0
    %103 = vmatpush.msra.mxu0 0.0
    %104 = vmatpush.msra.mxu0 0.0
    %105 = vmatpush.msra.mxu0 0.0
    %106 = vmatpush.msra.mxu0 0.0
    %107 = vmatpush.msra.mxu0 0.0
    %108 = vmatpush.msra.mxu0 0.0
    %109 = vmatpush.msra.mxu0 0.0
    %110 = vmatpush.msra.mxu0 0.0
    %111 = vmatpush.msra.mxu0 0.0
    %112 = vmatpush.msra.mxu0 0.0
    %113 = vmatpush.msra.mxu0 0.0
    %114 = vmatpush.msra.mxu0 0.0
    %115 = vmatpush.msra.mxu0 %v69
    %116 = vmatpush.msra.mxu0 %v66
    %117 = vmatpush.msra.mxu0 %v63
    %118 = vmatpush.msra.mxu0 %v60
    %119 = vmatmul.f32.gmra.mxu0 %v81
    %v120 = vpop.f32.mrf.mxu0
    %v121 = vadd.f32 %v74, %v120
    %122 = vdwg.mxu0
    %123 = vmatpush.msra.mxu0 0.0
    %124 = vmatpush.msra.mxu0 0.0
    %125 = vmatpush.msra.mxu0 0.0
    %126 = vmatpush.msra.mxu0 0.0
    %127 = vmatpush.msra.mxu0 0.0
    %128 = vmatpush.msra.mxu0 0.0
    %129 = vmatpush.msra.mxu0 0.0
    %130 = vmatpush.msra.mxu0 0.0
    %131 = vmatpush.msra.mxu0 0.0
    %132 = vmatpush.msra.mxu0 0.0
    %133 = vmatpush.msra.mxu0 0.0
    %134 = vmatpush.msra.mxu0 0.0
    %135 = vmatpush.msra.mxu0 %v70
    %136 = vmatpush.msra.mxu0 %v67
    %137 = vmatpush.msra.mxu0 %v64
    %138 = vmatpush.msra.mxu0 %v61
    %139 = vmatmul.f32.gmra.mxu0 %v81
    %v140 = vpop.f32.mrf.mxu0
    %v141 = vadd.f32 %v75, %v140
    %142 = vdwg.mxu0
    %143 = vst [vmem:[#allocation8] sm:$0xff] %v101
    %144 = vst [vmem:[#allocation8 + $0x8] sm:$0xff] %v121
    %145 = vst [vmem:[#allocation8 + $0x10] sm:$0xff] %v141
    // Predicated region
    $region26: #{tpu_custom_call.1} parent=1 // pred_check
      _
    $region27: #{tpu_custom_call.1} parent=1 // pred_check_branch
      %147 = sbr.rel (0) target = $region29
    $region28: #{tpu_custom_call.1} parent=1 // pred_region
      %149 = vsyncadd [#allocation4], 0
      %s151 = sshll.u32 [#allocation8], 4
      %s152 = int_to_ptr.vmem [resolvable:$true] %s151
      %s153 = sshll.u32 %s3, 4
      %s154 = int_to_ptr.hbm [resolvable:$true] %s153
      %156 = dma.vmem_to_hbm [thread:$0]  %s152, 384, %s154, [#allocation4]
    $region29: #{tpu_custom_call.1} parent=1 // pred_fallthru
      _
    // Predicated region
    $region30: #{tpu_custom_call.1} parent=1 // pred_check
      _
    $region31: #{tpu_custom_call.1} parent=1 // pred_check_branch
      %158 = sbr.rel (0) target = $region33
    $region32: #{tpu_custom_call.1} parent=1 // pred_region
      %160 = dma.done [#allocation4], 384
    $region33: #{tpu_custom_call.1} parent=1 // pred_fallthru
      _
    %161 = vsyncpa [#allocation3], 1
    %162 = vsyncpa [#allocation6], 1
    %163 = vsyncpa [#allocation4], 1

</llo_original>
